<compile_context>
chip_gen: v7x
topology: tpu7x:2x2x1
jax: 0.10.0
libtpu: 0.0.40
codegen_flags: <defaults>
</compile_context>

<pallas_src>
import jax
import jax.numpy as jnp
from jax.experimental import pallas as pl
from jax.experimental.pallas import tpu as pltpu


# ---------------------------------------------------------------------------
# Fused MAGNN_Agg dense epilogue kernel
# ---------------------------------------------------------------------------

def _magnn_agg_kernel(s1_ref, s2_ref, s12_ref, w1_ref, w2_ref, w3_ref,
                      b_ref, att_ref, o_ref):
    """Per row-tile: three Linear+ReLU heads + attention-softmax combine.

    s*_ref : [TM, D]  metapath-aggregated node features
    w*_ref : [D, D]   pre-transposed Linear weights (y = x @ W^T -> x @ w)
    b_ref  : [3, D]   stacked biases (fc_s1s, fc_s2s, fc_s12s)
    att_ref: [3, D]   att_vec
    o_ref  : [TM, D]
    """
    h1 = jnp.maximum(
        jnp.dot(s1_ref[...], w1_ref[...], preferred_element_type=jnp.float32)
        + b_ref[0:1, :], 0.0)
    h2 = jnp.maximum(
        jnp.dot(s2_ref[...], w2_ref[...], preferred_element_type=jnp.float32)
        + b_ref[1:2, :], 0.0)
    h3 = jnp.maximum(
        jnp.dot(s12_ref[...], w3_ref[...], preferred_element_type=jnp.float32)
        + b_ref[2:3, :], 0.0)

    # attention scores (lane reduction on XLU), softmax over the 3 metapaths
    e1 = jnp.sum(h1 * att_ref[0:1, :], axis=-1, keepdims=True)   # [TM, 1]
    e2 = jnp.sum(h2 * att_ref[1:2, :], axis=-1, keepdims=True)
    e3 = jnp.sum(h3 * att_ref[2:3, :], axis=-1, keepdims=True)
    m = jnp.maximum(jnp.maximum(e1, e2), e3)
    a1 = jnp.exp(e1 - m)   # exp lowers to the EUP slot (off the VALU path)
    a2 = jnp.exp(e2 - m)
    a3 = jnp.exp(e3 - m)
    inv = 1.0 / (a1 + a2 + a3)          # [TM, 1] -- exact, negligible cost
    o_ref[...] = ((h1 * a1 + h2 * a2 + h3 * a3) * inv).astype(o_ref.dtype)


def _round_up(x, m):
    return ((x + m - 1) // m) * m


def magnn_agg_fused(s1, s2, s12, w1, w2, w3, b, att, *, tile_m=256):
    """Fused 3x(Linear+ReLU) + attention-softmax combine over metapaths."""
    n, d = s1.shape
    # Row tile: big enough to amortize the ~0.35us per-grid-step overhead and
    # fill the MXU along M, but no bigger than the (8-aligned) row count.
    tm = min(_round_up(tile_m, 8), _round_up(n, 8))
    n_pad = _round_up(n, tm)
    if n_pad != n:
        pad = ((0, n_pad - n), (0, 0))
        s1, s2, s12 = jnp.pad(s1, pad), jnp.pad(s2, pad), jnp.pad(s12, pad)

    row_spec = pl.BlockSpec((tm, d), lambda i: (i, 0))
    w_spec = pl.BlockSpec((d, d), lambda i: (0, 0))     # constant across grid
    vec_spec = pl.BlockSpec((3, d), lambda i: (0, 0))   # constant across grid

    out = pl.pallas_call(
        _magnn_agg_kernel,
        out_shape=jax.ShapeDtypeStruct((n_pad, d), s1.dtype),
        grid_spec=pltpu.PrefetchScalarGridSpec(
            num_scalar_prefetch=0,
            grid=(n_pad // tm,),
            in_specs=[row_spec, row_spec, row_spec,
                      w_spec, w_spec, w_spec,
                      vec_spec, vec_spec],
            out_specs=row_spec,
        ),
        compiler_params=pltpu.CompilerParams(
            dimension_semantics=("parallel",),
            vmem_limit_bytes=32 * 1024 * 1024,
        ),
    )(s1, s2, s12, w1, w2, w3, b, att)
    # Padded rows hold relu(bias)-derived junk; slice them away.
    return out[:n] if n_pad != n else out


# ---------------------------------------------------------------------------
# Pure-JAX helpers (graph stage + reference epilogue)
# ---------------------------------------------------------------------------

def _scatter_mean(src, index, dim_size):
    """torch_scatter.scatter_mean: mean over duplicate indices, 0 if empty."""
    d = src.shape[-1]
    summed = jnp.zeros((dim_size, d), src.dtype).at[index].add(src)
    count = jnp.zeros((dim_size,), src.dtype).at[index].add(1.0)
    return summed / jnp.maximum(count, 1.0)[:, None]


def _agg_epilogue_ref(s1, s2, s12, w1, w2, w3, b, att):
    """Pure-JAX reference for the fused kernel (matches torch math)."""
    h1 = jnp.maximum(s1 @ w1 + b[0], 0.0)
    h2 = jnp.maximum(s2 @ w2 + b[1], 0.0)
    h3 = jnp.maximum(s12 @ w3 + b[2], 0.0)
    all_mp = jnp.stack([h1, h2, h3], axis=1)                 # [N, 3, D]
    scores = jnp.sum(all_mp * att[None, :, :], axis=2)       # [N, 3]
    weights = jax.nn.softmax(scores, axis=1)[..., None]      # [N, 3, 1]
    return jnp.sum(all_mp * weights, axis=1)                 # [N, D]


def _init_linear(key, in_features, out_features):
    """nn.Linear init: uniform(-1/sqrt(K), 1/sqrt(K)); returns (W^T, b)."""
    kw, kb = jax.random.split(key)
    bound = 1.0 / jnp.sqrt(jnp.float32(in_features))
    w_t = jax.random.uniform(
        kw, (in_features, out_features), jnp.float32, -bound, bound)
    b = jax.random.uniform(kb, (out_features,), jnp.float32, -bound, bound)
    return w_t, b


# ---------------------------------------------------------------------------
# Model classes mirroring MAGNN_Agg / MAG_NetEn
# ---------------------------------------------------------------------------

class MAGNNAggPallas:
    """JAX/Pallas equivalent of MAGNN_Agg (inference: dropout is identity)."""

    def __init__(self, embed_dim, key):
        k1, k2, k3, k4 = jax.random.split(key, 4)
        self.embed_dim = embed_dim
        self.w1, b1 = _init_linear(k1, embed_dim, embed_dim)   # fc_s1s
        self.w2, b2 = _init_linear(k2, embed_dim, embed_dim)   # fc_s2s
        self.w3, b3 = _init_linear(k3, embed_dim, embed_dim)   # fc_s12s
        self.b = jnp.stack([b1, b2, b3], axis=0)               # [3, D]
        # xavier_uniform_ for a [3, D] tensor: fan_out=3, fan_in=D
        bound = jnp.sqrt(6.0 / (3.0 + embed_dim))
        self.att_vec = jax.random.uniform(
            k4, (3, embed_dim), jnp.float32, -bound, bound)

    def _metapath_inputs(self, x_list, edge_index_list, x_node,
                         edge_weight_list, edge_index_12):
        # TODO(synk): the gather + scatter_mean graph stage is data-dependent
        # (irregular indices) and stays in XLA; only the dense epilogue runs
        # in the Pallas kernel.
        ei_s1 = edge_index_list[1]
        ei_s2 = edge_index_list[2]
        if edge_weight_list[0] is None:
            edge_weight_list = [jnp.ones((ei.shape[1],), x_node.dtype)
                                for ei in edge_index_list]
        ew1 = edge_weight_list[1][:, None]
        ew2 = edge_weight_list[2][:, None]

        n_node = x_node.shape[0]
        n_s1 = x_list[1].shape[0]
        n_s2 = x_list[2].shape[0]

        # metapath s1 -> s
        msg_1 = _scatter_mean(x_node[ei_s1[0]] * ew1, ei_s1[1], n_s1)
        net_msg1 = (msg_1 + x_list[1]) / 2.0
        s1s_in = _scatter_mean(net_msg1[ei_s1[1]], ei_s1[0], n_node)

        # metapath s2 -> s
        msg_2 = _scatter_mean(x_node[ei_s2[0]] * ew2, ei_s2[1], n_s2)
        net_msg2 = (msg_2 + x_list[2]) / 2.0
        s2s_in = _scatter_mean(net_msg2[ei_s2[1]], ei_s2[0], n_node)

        # metapath s1 -> s2 -> s (torch recomputes msg_1; identical values)
        msg_2_12 = _scatter_mean(net_msg1[edge_index_12[0]],
                                 edge_index_12[1], n_s2)
        net_msg2_12 = (msg_2_12 + x_list[2]) / 2.0
        s12s_in = _scatter_mean(net_msg2_12[ei_s2[1]] * ew2, ei_s2[0], n_node)

        return s1s_in, s2s_in, s12s_in

    def __call__(self, x_list, edge_index_list, x_node, edge_weight_list,
                 edge_index_12, use_pallas=True):
        s1, s2, s12 = self._metapath_inputs(
            x_list, edge_index_list, x_node, edge_weight_list, edge_index_12)
        # F.dropout(..., training=False) -> identity in inference mode.
        if use_pallas:
            return magnn_agg_fused(s1, s2, s12, self.w1, self.w2, self.w3,
                                   self.b, self.att_vec)
        return _agg_epilogue_ref(s1, s2, s12, self.w1, self.w2, self.w3,
                                 self.b, self.att_vec)


class MAGNetEnPallas:
    """JAX/Pallas equivalent of MAG_NetEn."""

    def __init__(self, embed_dim, key):
        ka, kp, kv = jax.random.split(key, 3)
        self.a_het = MAGNNAggPallas(embed_dim, ka)
        self.p_het = MAGNNAggPallas(embed_dim, kp)
        self.v_het = MAGNNAggPallas(embed_dim, kv)

    def __call__(self, x_list, data, use_pallas=True):
        a_edges = [data['a', 'walk', 'a'], data['a', 'walk', 'p'],
                   data['a', 'walk', 'v']]
        p_edges = [data['p', 'walk', 'p'], data['p', 'walk', 'a'],
                   data['p', 'walk', 'v']]
        v_edges = [data['v', 'walk', 'v'], data['v', 'walk', 'a'],
                   data['v', 'walk', 'p']]
        edge_weight_list = [None, None, None]
        x_list = list(x_list)   # do not mutate the caller's list
        x_list[0] = self.a_het(x_list, a_edges, x_list[0], edge_weight_list,
                               p_edges[2], use_pallas=use_pallas)
        x_list[1] = self.p_het([x_list[1], x_list[0], x_list[2]], p_edges,
                               x_list[1], edge_weight_list, a_edges[2],
                               use_pallas=use_pallas)
        x_list[2] = self.v_het([x_list[2], x_list[0], x_list[1]], v_edges,
                               x_list[2], edge_weight_list, a_edges[1],
                               use_pallas=use_pallas)
        return x_list


# ---------------------------------------------------------------------------
# Demo / correctness check
# ---------------------------------------------------------------------------

if __name__ == "__main__":
    key = jax.random.PRNGKey(0)
    embed_dim = 128
    # deliberately NOT multiples of 8 -> exercises the padding/slicing path
    n_a, n_p, n_v = 12, 20, 6

    k_model, k_feat, k_edge = jax.random.split(key, 3)
    model = MAGNetEnPallas(embed_dim, k_model)

    kf = jax.random.split(k_feat, 3)
    x_list = [
        jax.random.normal(kf[0], (n_a, embed_dim), jnp.float32),
        jax.random.normal(kf[1], (n_p, embed_dim), jnp.float32),
        jax.random.normal(kf[2], (n_v, embed_dim), jnp.float32),
    ]

    def rand_edges(k, n_edges, n_src, n_dst):
        ks, kd = jax.random.split(k)
        src = jax.random.randint(ks, (n_edges,), 0, n_src, dtype=jnp.int32)
        dst = jax.random.randint(kd, (n_edges,), 0, n_dst, dtype=jnp.int32)
        return jnp.stack([src, dst], axis=0)

    ke = jax.random.split(k_edge, 9)
    data = {
        ('a', 'walk', 'a'): rand_edges(ke[0], 40, n_a, n_a),
        ('a', 'walk', 'p'): rand_edges(ke[1], 48, n_a, n_p),
        ('a', 'walk', 'v'): rand_edges(ke[2], 32, n_a, n_v),
        ('p', 'walk', 'p'): rand_edges(ke[3], 44, n_p, n_p),
        ('p', 'walk', 'a'): rand_edges(ke[4], 48, n_p, n_a),
        ('p', 'walk', 'v'): rand_edges(ke[5], 36, n_p, n_v),
        ('v', 'walk', 'v'): rand_edges(ke[6], 24, n_v, n_v),
        ('v', 'walk', 'a'): rand_edges(ke[7], 32, n_v, n_a),
        ('v', 'walk', 'p'): rand_edges(ke[8], 36, n_v, n_p),
    }

    outs = model(x_list, data, use_pallas=True)
    outs = [jax.block_until_ready(o) for o in outs]

    refs = model(x_list, data, use_pallas=False)
    for o, r in zip(outs, refs):
        assert o.shape == r.shape
        assert jnp.allclose(o, r, atol=2e-5, rtol=2e-5), "mismatch vs reference"

    print("KERNEL_OK")
</pallas_src>

<mosaic_0001>
module attributes {stable_mosaic.version = 11 : i64} {
  func.func @_magnn_agg_kernel(%arg0: i32, %arg1: memref<16x128xf32, #tpu.memory_space<vmem>>, %arg2: memref<16x128xf32, #tpu.memory_space<vmem>>, %arg3: memref<16x128xf32, #tpu.memory_space<vmem>>, %arg4: memref<128x128xf32, #tpu.memory_space<vmem>>, %arg5: memref<128x128xf32, #tpu.memory_space<vmem>>, %arg6: memref<128x128xf32, #tpu.memory_space<vmem>>, %arg7: memref<3x128xf32, #tpu.memory_space<vmem>>, %arg8: memref<3x128xf32, #tpu.memory_space<vmem>>, %arg9: memref<16x128xf32, #tpu.memory_space<vmem>>) attributes {dimension_semantics = [#tpu.dimension_semantics<parallel>], iteration_bounds = array<i64: 1>, scalar_prefetch = 0 : i64, scratch_operands = 0 : i64, tpu.core_type = #tpu.core_type<tc>, window_params = [{transform_indices = @transform_0, window_bounds = array<i64: 16, 128>}, {transform_indices = @transform_1, window_bounds = array<i64: 16, 128>}, {transform_indices = @transform_2, window_bounds = array<i64: 16, 128>}, {pipeline_mode = #tpu.pipeline_mode<synchronous>, transform_indices = @transform_3, window_bounds = array<i64: 128, 128>}, {pipeline_mode = #tpu.pipeline_mode<synchronous>, transform_indices = @transform_4, window_bounds = array<i64: 128, 128>}, {pipeline_mode = #tpu.pipeline_mode<synchronous>, transform_indices = @transform_5, window_bounds = array<i64: 128, 128>}, {pipeline_mode = #tpu.pipeline_mode<synchronous>, transform_indices = @transform_6, window_bounds = array<i64: 3, 128>}, {pipeline_mode = #tpu.pipeline_mode<synchronous>, transform_indices = @transform_7, window_bounds = array<i64: 3, 128>}, {transform_indices = @transform_8, window_bounds = array<i64: 16, 128>}]} {
    %c0 = arith.constant 0 : index
    %c0_0 = arith.constant 0 : index
    %0 = vector.load %arg1[%c0, %c0_0] : memref<16x128xf32, #tpu.memory_space<vmem>>, vector<16x128xf32>
    %c0_1 = arith.constant 0 : index
    %c0_2 = arith.constant 0 : index
    %1 = vector.load %arg4[%c0_1, %c0_2] : memref<128x128xf32, #tpu.memory_space<vmem>>, vector<128x128xf32>
    %cst = arith.constant dense<0.000000e+00> : vector<16x128xf32>
    %2 = tpu.matmul %0, %1, %cst {dimension_numbers = #tpu.dot_dimension_numbers<[1], [0], [0], [1], [0, 0, 1, 1], [], []>} : vector<16x128xf32>, vector<128x128xf32>, vector<16x128xf32> -> vector<16x128xf32>
    %c0_3 = arith.constant 0 : index
    %c0_4 = arith.constant 0 : index
    %3 = vector.load %arg7[%c0_3, %c0_4] : memref<3x128xf32, #tpu.memory_space<vmem>>, vector<1x128xf32>
    %4 = vector.broadcast %3 : vector<1x128xf32> to vector<16x128xf32>
    %5 = arith.addf %2, %4 : vector<16x128xf32>
    %cst_5 = arith.constant 0.000000e+00 : f32
    %6 = vector.broadcast %cst_5 : f32 to vector<16x128xf32>
    %7 = arith.maximumf %5, %6 : vector<16x128xf32>
    %c0_6 = arith.constant 0 : index
    %c0_7 = arith.constant 0 : index
    %8 = vector.load %arg2[%c0_6, %c0_7] : memref<16x128xf32, #tpu.memory_space<vmem>>, vector<16x128xf32>
    %c0_8 = arith.constant 0 : index
    %c0_9 = arith.constant 0 : index
    %9 = vector.load %arg5[%c0_8, %c0_9] : memref<128x128xf32, #tpu.memory_space<vmem>>, vector<128x128xf32>
    %cst_10 = arith.constant dense<0.000000e+00> : vector<16x128xf32>
    %10 = tpu.matmul %8, %9, %cst_10 {dimension_numbers = #tpu.dot_dimension_numbers<[1], [0], [0], [1], [0, 0, 1, 1], [], []>} : vector<16x128xf32>, vector<128x128xf32>, vector<16x128xf32> -> vector<16x128xf32>
    %c1 = arith.constant 1 : index
    %c0_11 = arith.constant 0 : index
    %11 = vector.load %arg7[%c1, %c0_11] : memref<3x128xf32, #tpu.memory_space<vmem>>, vector<1x128xf32>
    %12 = vector.broadcast %11 : vector<1x128xf32> to vector<16x128xf32>
    %13 = arith.addf %10, %12 : vector<16x128xf32>
    %cst_12 = arith.constant 0.000000e+00 : f32
    %14 = vector.broadcast %cst_12 : f32 to vector<16x128xf32>
    %15 = arith.maximumf %13, %14 : vector<16x128xf32>
    %c0_13 = arith.constant 0 : index
    %c0_14 = arith.constant 0 : index
    %16 = vector.load %arg3[%c0_13, %c0_14] : memref<16x128xf32, #tpu.memory_space<vmem>>, vector<16x128xf32>
    %c0_15 = arith.constant 0 : index
    %c0_16 = arith.constant 0 : index
    %17 = vector.load %arg6[%c0_15, %c0_16] : memref<128x128xf32, #tpu.memory_space<vmem>>, vector<128x128xf32>
    %cst_17 = arith.constant dense<0.000000e+00> : vector<16x128xf32>
    %18 = tpu.matmul %16, %17, %cst_17 {dimension_numbers = #tpu.dot_dimension_numbers<[1], [0], [0], [1], [0, 0, 1, 1], [], []>} : vector<16x128xf32>, vector<128x128xf32>, vector<16x128xf32> -> vector<16x128xf32>
    %c2 = arith.constant 2 : index
    %c0_18 = arith.constant 0 : index
    %19 = vector.load %arg7[%c2, %c0_18] : memref<3x128xf32, #tpu.memory_space<vmem>>, vector<1x128xf32>
    %20 = vector.broadcast %19 : vector<1x128xf32> to vector<16x128xf32>
    %21 = arith.addf %18, %20 : vector<16x128xf32>
    %cst_19 = arith.constant 0.000000e+00 : f32
    %22 = vector.broadcast %cst_19 : f32 to vector<16x128xf32>
    %23 = arith.maximumf %21, %22 : vector<16x128xf32>
    %c0_20 = arith.constant 0 : index
    %c0_21 = arith.constant 0 : index
    %24 = vector.load %arg8[%c0_20, %c0_21] : memref<3x128xf32, #tpu.memory_space<vmem>>, vector<1x128xf32>
    %25 = vector.broadcast %24 : vector<1x128xf32> to vector<16x128xf32>
    %26 = arith.mulf %7, %25 : vector<16x128xf32>
    %cst_22 = arith.constant dense<0.000000e+00> : vector<16xf32>
    %27 = vector.multi_reduction <add>, %26, %cst_22 [1] : vector<16x128xf32> to vector<16xf32>
    %28 = vector.shape_cast %27 : vector<16xf32> to vector<16x1xf32>
    %c1_23 = arith.constant 1 : index
    %c0_24 = arith.constant 0 : index
    %29 = vector.load %arg8[%c1_23, %c0_24] : memref<3x128xf32, #tpu.memory_space<vmem>>, vector<1x128xf32>
    %30 = vector.broadcast %29 : vector<1x128xf32> to vector<16x128xf32>
    %31 = arith.mulf %15, %30 : vector<16x128xf32>
    %cst_25 = arith.constant dense<0.000000e+00> : vector<16xf32>
    %32 = vector.multi_reduction <add>, %31, %cst_25 [1] : vector<16x128xf32> to vector<16xf32>
    %33 = vector.shape_cast %32 : vector<16xf32> to vector<16x1xf32>
    %c2_26 = arith.constant 2 : index
    %c0_27 = arith.constant 0 : index
    %34 = vector.load %arg8[%c2_26, %c0_27] : memref<3x128xf32, #tpu.memory_space<vmem>>, vector<1x128xf32>
    %35 = vector.broadcast %34 : vector<1x128xf32> to vector<16x128xf32>
    %36 = arith.mulf %23, %35 : vector<16x128xf32>
    %cst_28 = arith.constant dense<0.000000e+00> : vector<16xf32>
    %37 = vector.multi_reduction <add>, %36, %cst_28 [1] : vector<16x128xf32> to vector<16xf32>
    %38 = vector.shape_cast %37 : vector<16xf32> to vector<16x1xf32>
    %39 = arith.maximumf %28, %33 : vector<16x1xf32>
    %40 = arith.maximumf %39, %38 : vector<16x1xf32>
    %41 = arith.subf %28, %40 : vector<16x1xf32>
    %42 = math.exp %41 : vector<16x1xf32>
    %43 = arith.subf %33, %40 : vector<16x1xf32>
    %44 = math.exp %43 : vector<16x1xf32>
    %45 = arith.subf %38, %40 : vector<16x1xf32>
    %46 = math.exp %45 : vector<16x1xf32>
    %47 = arith.addf %42, %44 : vector<16x1xf32>
    %48 = arith.addf %47, %46 : vector<16x1xf32>
    %cst_29 = arith.constant 1.000000e+00 : f32
    %49 = vector.broadcast %cst_29 : f32 to vector<16x1xf32>
    %50 = arith.divf %49, %48 : vector<16x1xf32>
    %51 = vector.broadcast %42 : vector<16x1xf32> to vector<16x128xf32>
    %52 = arith.mulf %7, %51 : vector<16x128xf32>
    %53 = vector.broadcast %44 : vector<16x1xf32> to vector<16x128xf32>
    %54 = arith.mulf %15, %53 : vector<16x128xf32>
    %55 = arith.addf %52, %54 : vector<16x128xf32>
    %56 = vector.broadcast %46 : vector<16x1xf32> to vector<16x128xf32>
    %57 = arith.mulf %23, %56 : vector<16x128xf32>
    %58 = arith.addf %55, %57 : vector<16x128xf32>
    %59 = vector.broadcast %50 : vector<16x1xf32> to vector<16x128xf32>
    %60 = arith.mulf %58, %59 : vector<16x128xf32>
    %c0_30 = arith.constant 0 : index
    %c0_31 = arith.constant 0 : index
    %61 = vector.load %arg9[%c0_30, %c0_31] : memref<16x128xf32, #tpu.memory_space<vmem>>, vector<16x128xf32>
    tpu.vector_store %arg9[%c0_30, %c0_31], %60 {strides = array<i32>} : memref<16x128xf32, #tpu.memory_space<vmem>>, vector<16x128xf32>,
    return
  }
  func.func @transform_0(%arg0: i32) -> (i32, i32) {
    %c0_i32 = arith.constant 0 : i32
    %c0_i32_0 = arith.constant 0 : i32
    return %arg0, %c0_i32 : i32, i32
  }
  func.func @transform_1(%arg0: i32) -> (i32, i32) {
    %c0_i32 = arith.constant 0 : i32
    %c0_i32_0 = arith.constant 0 : i32
    return %arg0, %c0_i32 : i32, i32
  }
  func.func @transform_2(%arg0: i32) -> (i32, i32) {
    %c0_i32 = arith.constant 0 : i32
    %c0_i32_0 = arith.constant 0 : i32
    return %arg0, %c0_i32 : i32, i32
  }
  func.func @transform_3(%arg0: i32) -> (i32, i32) {
    %c0_i32 = arith.constant 0 : i32
    %c0_i32_0 = arith.constant 0 : i32
    %c0_i32_1 = arith.constant 0 : i32
    return %c0_i32, %c0_i32_0 : i32, i32
  }
  func.func @transform_4(%arg0: i32) -> (i32, i32) {
    %c0_i32 = arith.constant 0 : i32
    %c0_i32_0 = arith.constant 0 : i32
    %c0_i32_1 = arith.constant 0 : i32
    return %c0_i32, %c0_i32_0 : i32, i32
  }
  func.func @transform_5(%arg0: i32) -> (i32, i32) {
    %c0_i32 = arith.constant 0 : i32
    %c0_i32_0 = arith.constant 0 : i32
    %c0_i32_1 = arith.constant 0 : i32
    return %c0_i32, %c0_i32_0 : i32, i32
  }
  func.func @transform_6(%arg0: i32) -> (i32, i32) {
    %c0_i32 = arith.constant 0 : i32
    %c0_i32_0 = arith.constant 0 : i32
    %c0_i32_1 = arith.constant 0 : i32
    return %c0_i32, %c0_i32_0 : i32, i32
  }
  func.func @transform_7(%arg0: i32) -> (i32, i32) {
    %c0_i32 = arith.constant 0 : i32
    %c0_i32_0 = arith.constant 0 : i32
    %c0_i32_1 = arith.constant 0 : i32
    return %c0_i32, %c0_i32_0 : i32, i32
  }
  func.func @transform_8(%arg0: i32) -> (i32, i32) {
    %c0_i32 = arith.constant 0 : i32
    %c0_i32_0 = arith.constant 0 : i32
    return %arg0, %c0_i32 : i32, i32
  }
}

</mosaic_0001>

<llo_original>
// kernel: tpu_custom_call.1
$region0: #{tpu_custom_call.1}
  #allocation0 [shape = 'u32[]', space=smem, size = 0x4, offset = 0x4, fixed_abs, tag = 'smem constant byte address 0x4 - core index']
  #allocation1 [shape = 'u32[144,128]{1,0:T(1,128)}', space=vmem, size = 0x12000, scoped, tag = 'internal scratch']
  %s0 = inlined_call_operand.hbm [shape: f32[16,128], index: 0, kind: input, shape index: {}]
  %s1 = inlined_call_operand.hbm [shape: f32[16,128], index: 1, kind: input, shape index: {}]
  %s2 = inlined_call_operand.hbm [shape: f32[16,128], index: 2, kind: input, shape index: {}]
  %s3 = inlined_call_operand.hbm [shape: f32[128,128], index: 3, kind: input, shape index: {}]
  %s4 = inlined_call_operand.hbm [shape: f32[128,128], index: 4, kind: input, shape index: {}]
  %s5 = inlined_call_operand.hbm [shape: f32[128,128], index: 5, kind: input, shape index: {}]
  %s6 = inlined_call_operand.vmem [shape: f32[3,128], index: 6, kind: input, shape index: {}]
  %s7 = inlined_call_operand.vmem [shape: f32[3,128], index: 7, kind: input, shape index: {}]
  %s8 = inlined_call_operand.hbm [shape: f32[16,128], index: 8, kind: output, shape index: {}]
  %s9 = sld [smem:[#allocation0]]
  $region66: #{tpu_custom_call.1} parent=0
    _
  %s11 = ssub.s32 1, %s9
  %s12 = scalar_select 0, %s11, %s9
  $region1: #{tpu_custom_call.1} parent=0
    #allocation2 [shape = 'u8[8192]{0}', space=vmem, size = 0x2000, scoped, tag = 'input window, operand 0, single buffered']
    #allocation3 [shape = 's32[1]{0}', space=sflag, size = 0x4, scoped, tag = 'scoped memory for tpu_custom_call.1']
    #allocation4 [shape = 's32[1]{0}', space=sflag, size = 0x4, scoped, tag = 'scoped memory for tpu_custom_call.1']
    #allocation5 [shape = 'u8[8192]{0}', space=vmem, size = 0x2000, scoped, tag = 'input window, operand 1, single buffered']
    #allocation6 [shape = 's32[1]{0}', space=sflag, size = 0x4, scoped, tag = 'scoped memory for tpu_custom_call.1']
    #allocation7 [shape = 'u8[8192]{0}', space=vmem, size = 0x2000, scoped, tag = 'input window, operand 2, single buffered']
    #allocation8 [shape = 'u8[65536]{0}', space=vmem, size = 0x10000, scoped, tag = 'input window, operand 3, single buffered']
    #allocation9 [shape = 's32[1]{0}', space=sflag, size = 0x4, scoped, tag = 'scoped memory for tpu_custom_call.1']
    #allocation10 [shape = 'u8[65536]{0}', space=vmem, size = 0x10000, scoped, tag = 'input window, operand 4, single buffered']
    #allocation11 [shape = 'u8[65536]{0}', space=vmem, size = 0x10000, scoped, tag = 'input window, operand 5, single buffered']
    #allocation12 [shape = 's32[1]{0}', space=sflag, size = 0x4, scoped, tag = 'scoped memory for tpu_custom_call.1']
    #allocation13 [shape = 'u8[8192]{0}', space=vmem, size = 0x2000, scoped, tag = 'output window, operand 0, single buffered']
    %13 = vsyncpa [#allocation3], 0
    %14 = vsyncpa [#allocation6], 0
    %15 = vsyncpa [#allocation9], 0
    %16 = vsyncpa [#allocation12], 0
    %17 = vsyncpa [#allocation4], 0
    // Predicated region
    $region2: #{tpu_custom_call.1} parent=1 // pred_check
      _
    $region3: #{tpu_custom_call.1} parent=1 // pred_check_branch
      %19 = sbr.rel (0) target = $region5
    $region4: #{tpu_custom_call.1} parent=1 // pred_region
      %s21 = ssub.s32 256, 256
      %22 = vsyncadd [#allocation3], %s21
      %s23 = sshll.u32 [#allocation2], 4
      %s24 = int_to_ptr.vmem [resolvable:$true] %s23
      %29 = dma.hbm_to_vmem [thread:$0]  %s0, 256, %s24, [#allocation3], 128, 128, 8
    $region5: #{tpu_custom_call.1} parent=1 // pred_fallthru
      _
    // Predicated region
    $region6: #{tpu_custom_call.1} parent=1 // pred_check
      _
    $region7: #{tpu_custom_call.1} parent=1 // pred_check_branch
      %31 = sbr.rel (0) target = $region9
    $region8: #{tpu_custom_call.1} parent=1 // pred_region
      %s33 = ssub.s32 256, 256
      %34 = vsyncadd [#allocation6], %s33
      %s35 = sshll.u32 [#allocation5], 4
      %s36 = int_to_ptr.vmem [resolvable:$true] %s35
      %41 = dma.hbm_to_vmem [thread:$0]  %s1, 256, %s36, [#allocation6], 128, 128, 8
    $region9: #{tpu_custom_call.1} parent=1 // pred_fallthru
      _
    // Predicated region
    $region10: #{tpu_custom_call.1} parent=1 // pred_check
      _
    $region11: #{tpu_custom_call.1} parent=1 // pred_check_branch
      %43 = sbr.rel (0) target = $region13
    $region12: #{tpu_custom_call.1} parent=1 // pred_region
      %s45 = ssub.s32 256, 256
      %46 = vsyncadd [#allocation6], %s45
      %s47 = sshll.u32 [#allocation7], 4
      %s48 = int_to_ptr.vmem [resolvable:$true] %s47
      %53 = dma.hbm_to_vmem [thread:$0]  %s2, 256, %s48, [#allocation6], 128, 128, 8
    $region13: #{tpu_custom_call.1} parent=1 // pred_fallthru
      _
    // Predicated region
    $region14: #{tpu_custom_call.1} parent=1 // pred_check
      _
    $region15: #{tpu_custom_call.1} parent=1 // pred_check_branch
      %55 = sbr.rel (0) target = $region17
    $region16: #{tpu_custom_call.1} parent=1 // pred_region
      %s57 = ssub.s32 2048, 2048
      %58 = vsyncadd [#allocation9], %s57
      %s59 = sshll.u32 [#allocation8], 4
      %s60 = int_to_ptr.vmem [resolvable:$true] %s59
      %65 = dma.hbm_to_vmem [thread:$0]  %s3, 2048, %s60, [#allocation9], 128, 128, 8
    $region17: #{tpu_custom_call.1} parent=1 // pred_fallthru
      _
    // Predicated region
    $region18: #{tpu_custom_call.1} parent=1 // pred_check
      _
    $region19: #{tpu_custom_call.1} parent=1 // pred_check_branch
      %67 = sbr.rel (0) target = $region21
    $region20: #{tpu_custom_call.1} parent=1 // pred_region
      %s69 = ssub.s32 2048, 2048
      %70 = vsyncadd [#allocation9], %s69
      %s71 = sshll.u32 [#allocation10], 4
      %s72 = int_to_ptr.vmem [resolvable:$true] %s71
      %77 = dma.hbm_to_vmem [thread:$0]  %s4, 2048, %s72, [#allocation9], 128, 128, 8
    $region21: #{tpu_custom_call.1} parent=1 // pred_fallthru
      _
    // Predicated region
    $region22: #{tpu_custom_call.1} parent=1 // pred_check
      _
    $region23: #{tpu_custom_call.1} parent=1 // pred_check_branch
      %79 = sbr.rel (0) target = $region25
    $region24: #{tpu_custom_call.1} parent=1 // pred_region
      %s81 = ssub.s32 2048, 2048
      %82 = vsyncadd [#allocation12], %s81
      %s83 = sshll.u32 [#allocation11], 4
      %s84 = int_to_ptr.vmem [resolvable:$true] %s83
      %89 = dma.hbm_to_vmem [thread:$0]  %s5, 2048, %s84, [#allocation12], 128, 128, 8
    $region25: #{tpu_custom_call.1} parent=1 // pred_fallthru
      _
    // Predicated region
    $region26: #{tpu_custom_call.1} parent=1 // pred_check
      _
    $region27: #{tpu_custom_call.1} parent=1 // pred_check_branch
      %91 = sbr.rel (0) target = $region29
    $region28: #{tpu_custom_call.1} parent=1 // pred_region
      _
    $region29: #{tpu_custom_call.1} parent=1 // pred_fallthru
      _
    // Predicated region
    $region30: #{tpu_custom_call.1} parent=1 // pred_check
      _
    $region31: #{tpu_custom_call.1} parent=1 // pred_check_branch
      %93 = sbr.rel (0) target = $region33
    $region32: #{tpu_custom_call.1} parent=1 // pred_region
      _
    $region33: #{tpu_custom_call.1} parent=1 // pred_fallthru
      _
    // Predicated region
    $region34: #{tpu_custom_call.1} parent=1 // pred_check
      _
    $region35: #{tpu_custom_call.1} parent=1 // pred_check_branch
      %95 = sbr.rel (0) target = $region37
    $region36: #{tpu_custom_call.1} parent=1 // pred_region
      %96 = dma.done [#allocation3], 256
    $region37: #{tpu_custom_call.1} parent=1 // pred_fallthru
      _
    // Predicated region
    $region38: #{tpu_custom_call.1} parent=1 // pred_check
      _
    $region39: #{tpu_custom_call.1} parent=1 // pred_check_branch
      %98 = sbr.rel (0) target = $region41
    $region40: #{tpu_custom_call.1} parent=1 // pred_region
      %99 = dma.done [#allocation6], 256
    $region41: #{tpu_custom_call.1} parent=1 // pred_fallthru
      _
    // Predicated region
    $region42: #{tpu_custom_call.1} parent=1 // pred_check
      _
    $region43: #{tpu_custom_call.1} parent=1 // pred_check_branch
      %101 = sbr.rel (0) target = $region45
    $region44: #{tpu_custom_call.1} parent=1 // pred_region
      %102 = dma.done [#allocation6], 256
    $region45: #{tpu_custom_call.1} parent=1 // pred_fallthru
      _
    // Predicated region
    $region46: #{tpu_custom_call.1} parent=1 // pred_check
      _
    $region47: #{tpu_custom_call.1} parent=1 // pred_check_branch
      %104 = sbr.rel (0) target = $region49
    $region48: #{tpu_custom_call.1} parent=1 // pred_region
      %105 = dma.done [#allocation9], 2048
    $region49: #{tpu_custom_call.1} parent=1 // pred_fallthru
      _
    // Predicated region
    $region50: #{tpu_custom_call.1} parent=1 // pred_check
      _
    $region51: #{tpu_custom_call.1} parent=1 // pred_check_branch
      %107 = sbr.rel (0) target = $region53
    $region52: #{tpu_custom_call.1} parent=1 // pred_region
      %108 = dma.done [#allocation9], 2048
    $region53: #{tpu_custom_call.1} parent=1 // pred_fallthru
      _
    // Predicated region
    $region54: #{tpu_custom_call.1} parent=1 // pred_check
      _
    $region55: #{tpu_custom_call.1} parent=1 // pred_check_branch
      %110 = sbr.rel (0) target = $region57
    $region56: #{tpu_custom_call.1} parent=1 // pred_region
      %111 = dma.done [#allocation12], 2048
    $region57: #{tpu_custom_call.1} parent=1 // pred_fallthru
      _
    %v112 = vld [vmem:[#allocation2] sm:$0xff]
    %v113 = vld [vmem:[#allocation2 + $0x8] sm:$0xff]
    %v114 = vld [vmem:[#allocation8] sm:$0xff]
    %v115 = vld [vmem:[#allocation8 + $0x8] sm:$0xff]
    %v116 = vld [vmem:[#allocation8 + $0x10] sm:$0xff]
    %v117 = vld [vmem:[#allocation8 + $0x18] sm:$0xff]
    %v118 = vld [vmem:[#allocation8 + $0x20] sm:$0xff]
    %v119 = vld [vmem:[#allocation8 + $0x28] sm:$0xff]
    %v120 = vld [vmem:[#allocation8 + $0x30] sm:$0xff]
    %v121 = vld [vmem:[#allocation8 + $0x38] sm:$0xff]
    %v122 = vld [vmem:[#allocation8 + $0x40] sm:$0xff]
    %v123 = vld [vmem:[#allocation8 + $0x48] sm:$0xff]
    %v124 = vld [vmem:[#allocation8 + $0x50] sm:$0xff]
    %v125 = vld [vmem:[#allocation8 + $0x58] sm:$0xff]
    %v126 = vld [vmem:[#allocation8 + $0x60] sm:$0xff]
    %v127 = vld [vmem:[#allocation8 + $0x68] sm:$0xff]
    %v128 = vld [vmem:[#allocation8 + $0x70] sm:$0xff]
    %v129 = vld [vmem:[#allocation8 + $0x78] sm:$0xff]
    %v130 = vld [vmem:[%s6] sm:$0x1]
    %v131 = vlaneseq
    %v132 = vshrl.u32 %v131, 7
    %v133 = vsub.s32 0, %v132
    %v134 = vrot.slane %v130, %v133
    %135 = vmatprep.subr.mxu0 0.0
    %136 = vmatpush1.msra.mxu0 %v114
    %137 = vmatprep.subr.mxu0 0.0
    %138 = vmatpush1.msra.mxu0 %v115
    %139 = vmatprep.subr.mxu0 0.0
    %140 = vmatpush1.msra.mxu0 %v116
    %141 = vmatprep.subr.mxu0 0.0
    %142 = vmatpush1.msra.mxu0 %v117
    %143 = vmatprep.subr.mxu0 0.0
    %144 = vmatpush1.msra.mxu0 %v118
    %145 = vmatprep.subr.mxu0 0.0
    %146 = vmatpush1.msra.mxu0 %v119
    %147 = vmatprep.subr.mxu0 0.0
    %148 = vmatpush1.msra.mxu0 %v120
    %149 = vmatprep.subr.mxu0 0.0
    %150 = vmatpush1.msra.mxu0 %v121
    %151 = vmatprep.subr.mxu0 0.0
    %152 = vmatpush1.msra.mxu0 %v122
    %153 = vmatprep.subr.mxu0 0.0
    %154 = vmatpush1.msra.mxu0 %v123
    %155 = vmatprep.subr.mxu0 0.0
    %156 = vmatpush1.msra.mxu0 %v124
    %157 = vmatprep.subr.mxu0 0.0
    %158 = vmatpush1.msra.mxu0 %v125
    %159 = vmatprep.subr.mxu0 0.0
    %160 = vmatpush1.msra.mxu0 %v126
    %161 = vmatprep.subr.mxu0 0.0
    %162 = vmatpush1.msra.mxu0 %v127
    %163 = vmatprep.subr.mxu0 0.0
    %164 = vmatpush1.msra.mxu0 %v128
    %165 = vmatprep.subr.mxu0 0.0
    %166 = vmatpush1.msra.mxu0 %v129
    %167 = vmatprep.subr.mxu0 0.0
    %168 = vmatpush1.msra.mxu0 0.0
    %169 = vmatprep.subr.mxu0 0.0
    %170 = vmatpush1.msra.mxu0 0.0
    %171 = vmatprep.subr.mxu0 0.0
    %172 = vmatpush1.msra.mxu0 0.0
    %173 = vmatprep.subr.mxu0 0.0
    %174 = vmatpush1.msra.mxu0 0.0
    %175 = vmatprep.subr.mxu0 0.0
    %176 = vmatpush1.msra.mxu0 0.0
    %177 = vmatprep.subr.mxu0 0.0
    %178 = vmatpush1.msra.mxu0 0.0
    %179 = vmatprep.subr.mxu0 0.0
    %180 = vmatpush1.msra.mxu0 0.0
    %181 = vmatprep.subr.mxu0 0.0
    %182 = vmatpush1.msra.mxu0 0.0
    %183 = vmatprep.subr.mxu0 0.0
    %184 = vmatpush1.msra.mxu0 0.0
    %185 = vmatprep.subr.mxu0 0.0
    %186 = vmatpush1.msra.mxu0 0.0
    %187 = vmatprep.subr.mxu0 0.0
    %188 = vmatpush1.msra.mxu0 0.0
    %189 = vmatprep.subr.mxu0 0.0
    %190 = vmatpush1.msra.mxu0 0.0
    %191 = vmatprep.subr.mxu0 0.0
    %192 = vmatpush1.msra.mxu0 0.0
    %193 = vmatprep.subr.mxu0 0.0
    %194 = vmatpush1.msra.mxu0 0.0
    %195 = vmatprep.subr.mxu0 0.0
    %196 = vmatpush1.msra.mxu0 0.0
    %197 = vmatprep.subr.mxu0 0.0
    %198 = vmatpush1.msra.mxu0 0.0
    %199 = vmatprep.mubr.f32.mxu0 0.0
    %200 = vmatmul.mubr.f32.gmra.mrb[0].mxu0 %v112
    %v201 = vpop.f32.mrb[0].mxu0
    %v202 = vadd.f32 %v134, %v201
    %v203 = vpop.f32.mrb[0].mxu0
    %204 = vmatprep.mubr.f32.mxu0 0.0
    %205 = vmatmul.mubr.f32.gmra.mrb[0].mxu0 %v113
    %v206 = vpop.f32.mrb[0].mxu0
    %v207 = vadd.f32 %v134, %v206
    %v208 = vpop.f32.mrb[0].mxu0
    %209 = vdwg.mxu0
    %v210 = vmax.f32 %v202, 0.0
    %v211 = vmax.f32 %v207, 0.0
    %v212 = vld [vmem:[#allocation5] sm:$0xff]
    %v213 = vld [vmem:[#allocation5 + $0x8] sm:$0xff]
    %v214 = vld [vmem:[#allocation10] sm:$0xff]
    %v215 = vld [vmem:[#allocation10 + $0x8] sm:$0xff]
    %v216 = vld [vmem:[#allocation10 + $0x10] sm:$0xff]
    %v217 = vld [vmem:[#allocation10 + $0x18] sm:$0xff]
    %v218 = vld [vmem:[#allocation10 + $0x20] sm:$0xff]
    %v219 = vld [vmem:[#allocation10 + $0x28] sm:$0xff]
    %v220 = vld [vmem:[#allocation10 + $0x30] sm:$0xff]
    %v221 = vld [vmem:[#allocation10 + $0x38] sm:$0xff]
    %v222 = vld [vmem:[#allocation10 + $0x40] sm:$0xff]
    %v223 = vld [vmem:[#allocation10 + $0x48] sm:$0xff]
    %v224 = vld [vmem:[#allocation10 + $0x50] sm:$0xff]
    %v225 = vld [vmem:[#allocation10 + $0x58] sm:$0xff]
    %v226 = vld [vmem:[#allocation10 + $0x60] sm:$0xff]
    %v227 = vld [vmem:[#allocation10 + $0x68] sm:$0xff]
    %v228 = vld [vmem:[#allocation10 + $0x70] sm:$0xff]
    %v229 = vld [vmem:[#allocation10 + $0x78] sm:$0xff]
    %v230 = vld [vmem:[%s6 + $0x1] sm:$0x1]
    %v231 = vlaneseq
    %v232 = vshrl.u32 %v231, 7
    %v233 = vsub.s32 0, %v232
    %v234 = vrot.slane %v230, %v233
    %235 = vmatprep.subr.mxu0 0.0
    %236 = vmatpush1.msra.mxu0 %v214
    %237 = vmatprep.subr.mxu0 0.0
    %238 = vmatpush1.msra.mxu0 %v215
    %239 = vmatprep.subr.mxu0 0.0
    %240 = vmatpush1.msra.mxu0 %v216
    %241 = vmatprep.subr.mxu0 0.0
    %242 = vmatpush1.msra.mxu0 %v217
    %243 = vmatprep.subr.mxu0 0.0
    %244 = vmatpush1.msra.mxu0 %v218
    %245 = vmatprep.subr.mxu0 0.0
    %246 = vmatpush1.msra.mxu0 %v219
    %247 = vmatprep.subr.mxu0 0.0
    %248 = vmatpush1.msra.mxu0 %v220
    %249 = vmatprep.subr.mxu0 0.0
    %250 = vmatpush1.msra.mxu0 %v221
    %251 = vmatprep.subr.mxu0 0.0
    %252 = vmatpush1.msra.mxu0 %v222
    %253 = vmatprep.subr.mxu0 0.0
    %254 = vmatpush1.msra.mxu0 %v223
    %255 = vmatprep.subr.mxu0 0.0
    %256 = vmatpush1.msra.mxu0 %v224
    %257 = vmatprep.subr.mxu0 0.0
    %258 = vmatpush1.msra.mxu0 %v225
    %259 = vmatprep.subr.mxu0 0.0
    %260 = vmatpush1.msra.mxu0 %v226
    %261 = vmatprep.subr.mxu0 0.0
    %262 = vmatpush1.msra.mxu0 %v227
    %263 = vmatprep.subr.mxu0 0.0
    %264 = vmatpush1.msra.mxu0 %v228
    %265 = vmatprep.subr.mxu0 0.0
    %266 = vmatpush1.msra.mxu0 %v229
    %267 = vmatprep.subr.mxu0 0.0
    %268 = vmatpush1.msra.mxu0 0.0
    %269 = vmatprep.subr.mxu0 0.0
    %270 = vmatpush1.msra.mxu0 0.0
    %271 = vmatprep.subr.mxu0 0.0
    %272 = vmatpush1.msra.mxu0 0.0
    %273 = vmatprep.subr.mxu0 0.0
    %274 = vmatpush1.msra.mxu0 0.0
    %275 = vmatprep.subr.mxu0 0.0
    %276 = vmatpush1.msra.mxu0 0.0
    %277 = vmatprep.subr.mxu0 0.0
    %278 = vmatpush1.msra.mxu0 0.0
    %279 = vmatprep.subr.mxu0 0.0
    %280 = vmatpush1.msra.mxu0 0.0
    %281 = vmatprep.subr.mxu0 0.0
    %282 = vmatpush1.msra.mxu0 0.0
    %283 = vmatprep.subr.mxu0 0.0
    %284 = vmatpush1.msra.mxu0 0.0
    %285 = vmatprep.subr.mxu0 0.0
    %286 = vmatpush1.msra.mxu0 0.0
    %287 = vmatprep.subr.mxu0 0.0
    %288 = vmatpush1.msra.mxu0 0.0
    %289 = vmatprep.subr.mxu0 0.0
    %290 = vmatpush1.msra.mxu0 0.0
    %291 = vmatprep.subr.mxu0 0.0
    %292 = vmatpush1.msra.mxu0 0.0
    %293 = vmatprep.subr.mxu0 0.0
    %294 = vmatpush1.msra.mxu0 0.0
    %295 = vmatprep.subr.mxu0 0.0
    %296 = vmatpush1.msra.mxu0 0.0
    %297 = vmatprep.subr.mxu0 0.0
    %298 = vmatpush1.msra.mxu0 0.0
    %299 = vmatprep.mubr.f32.mxu0 0.0
    %300 = vmatmul.mubr.f32.gmra.mrb[0].mxu0 %v212
    %v301 = vpop.f32.mrb[0].mxu0
    %v302 = vadd.f32 %v234, %v301
    %v303 = vpop.f32.mrb[0].mxu0
    %304 = vmatprep.mubr.f32.mxu0 0.0
    %305 = vmatmul.mubr.f32.gmra.mrb[0].mxu0 %v213
    %v306 = vpop.f32.mrb[0].mxu0
    %v307 = vadd.f32 %v234, %v306
    %v308 = vpop.f32.mrb[0].mxu0
    %309 = vdwg.mxu0
    %v310 = vmax.f32 %v302, 0.0
    %v311 = vmax.f32 %v307, 0.0
    %v312 = vld [vmem:[#allocation7] sm:$0xff]
    %v313 = vld [vmem:[#allocation7 + $0x8] sm:$0xff]
    %v314 = vld [vmem:[#allocation11] sm:$0xff]
    %v315 = vld [vmem:[#allocation11 + $0x8] sm:$0xff]
    %v316 = vld [vmem:[#allocation11 + $0x10] sm:$0xff]
    %v317 = vld [vmem:[#allocation11 + $0x18] sm:$0xff]
    %v318 = vld [vmem:[#allocation11 + $0x20] sm:$0xff]
    %v319 = vld [vmem:[#allocation11 + $0x28] sm:$0xff]
    %v320 = vld [vmem:[#allocation11 + $0x30] sm:$0xff]
    %v321 = vld [vmem:[#allocation11 + $0x38] sm:$0xff]
    %v322 = vld [vmem:[#allocation11 + $0x40] sm:$0xff]
    %v323 = vld [vmem:[#allocation11 + $0x48] sm:$0xff]
    %v324 = vld [vmem:[#allocation11 + $0x50] sm:$0xff]
    %v325 = vld [vmem:[#allocation11 + $0x58] sm:$0xff]
    %v326 = vld [vmem:[#allocation11 + $0x60] sm:$0xff]
    %v327 = vld [vmem:[#allocation11 + $0x68] sm:$0xff]
    %v328 = vld [vmem:[#allocation11 + $0x70] sm:$0xff]
    %v329 = vld [vmem:[#allocation11 + $0x78] sm:$0xff]
    %v330 = vld [vmem:[%s6 + $0x2] sm:$0x1]
    %v331 = vlaneseq
    %v332 = vshrl.u32 %v331, 7
    %v333 = vsub.s32 0, %v332
    %v334 = vrot.slane %v330, %v333
    %335 = vmatprep.subr.mxu0 0.0
    %336 = vmatpush1.msra.mxu0 %v314
    %337 = vmatprep.subr.mxu0 0.0
    %338 = vmatpush1.msra.mxu0 %v315
    %339 = vmatprep.subr.mxu0 0.0
    %340 = vmatpush1.msra.mxu0 %v316
    %341 = vmatprep.subr.mxu0 0.0
    %342 = vmatpush1.msra.mxu0 %v317
    %343 = vmatprep.subr.mxu0 0.0
    %344 = vmatpush1.msra.mxu0 %v318
    %345 = vmatprep.subr.mxu0 0.0
    %346 = vmatpush1.msra.mxu0 %v319
    %347 = vmatprep.subr.mxu0 0.0
    %348 = vmatpush1.msra.mxu0 %v320
    %349 = vmatprep.subr.mxu0 0.0
    %350 = vmatpush1.msra.mxu0 %v321
    %351 = vmatprep.subr.mxu0 0.0
    %352 = vmatpush1.msra.mxu0 %v322
    %353 = vmatprep.subr.mxu0 0.0
    %354 = vmatpush1.msra.mxu0 %v323
    %355 = vmatprep.subr.mxu0 0.0
    %356 = vmatpush1.msra.mxu0 %v324
    %357 = vmatprep.subr.mxu0 0.0
    %358 = vmatpush1.msra.mxu0 %v325
    %359 = vmatprep.subr.mxu0 0.0
    %360 = vmatpush1.msra.mxu0 %v326
    %361 = vmatprep.subr.mxu0 0.0
    %362 = vmatpush1.msra.mxu0 %v327
    %363 = vmatprep.subr.mxu0 0.0
    %364 = vmatpush1.msra.mxu0 %v328
    %365 = vmatprep.subr.mxu0 0.0
    %366 = vmatpush1.msra.mxu0 %v329
    %367 = vmatprep.subr.mxu0 0.0
    %368 = vmatpush1.msra.mxu0 0.0
    %369 = vmatprep.subr.mxu0 0.0
    %370 = vmatpush1.msra.mxu0 0.0
    %371 = vmatprep.subr.mxu0 0.0
    %372 = vmatpush1.msra.mxu0 0.0
    %373 = vmatprep.subr.mxu0 0.0
    %374 = vmatpush1.msra.mxu0 0.0
    %375 = vmatprep.subr.mxu0 0.0
    %376 = vmatpush1.msra.mxu0 0.0
    %377 = vmatprep.subr.mxu0 0.0
    %378 = vmatpush1.msra.mxu0 0.0
    %379 = vmatprep.subr.mxu0 0.0
    %380 = vmatpush1.msra.mxu0 0.0
    %381 = vmatprep.subr.mxu0 0.0
    %382 = vmatpush1.msra.mxu0 0.0
    %383 = vmatprep.subr.mxu0 0.0
    %384 = vmatpush1.msra.mxu0 0.0
    %385 = vmatprep.subr.mxu0 0.0
    %386 = vmatpush1.msra.mxu0 0.0
    %387 = vmatprep.subr.mxu0 0.0
    %388 = vmatpush1.msra.mxu0 0.0
    %389 = vmatprep.subr.mxu0 0.0
    %390 = vmatpush1.msra.mxu0 0.0
    %391 = vmatprep.subr.mxu0 0.0
    %392 = vmatpush1.msra.mxu0 0.0
    %393 = vmatprep.subr.mxu0 0.0
    %394 = vmatpush1.msra.mxu0 0.0
    %395 = vmatprep.subr.mxu0 0.0
    %396 = vmatpush1.msra.mxu0 0.0
    %397 = vmatprep.subr.mxu0 0.0
    %398 = vmatpush1.msra.mxu0 0.0
    %399 = vmatprep.mubr.f32.mxu0 0.0
    %400 = vmatmul.mubr.f32.gmra.mrb[0].mxu0 %v312
    %v401 = vpop.f32.mrb[0].mxu0
    %v402 = vadd.f32 %v334, %v401
    %v403 = vpop.f32.mrb[0].mxu0
    %404 = vmatprep.mubr.f32.mxu0 0.0
    %405 = vmatmul.mubr.f32.gmra.mrb[0].mxu0 %v313
    %v406 = vpop.f32.mrb[0].mxu0
    %v407 = vadd.f32 %v334, %v406
    %v408 = vpop.f32.mrb[0].mxu0
    %409 = vdwg.mxu0
    %v410 = vmax.f32 %v402, 0.0
    %v411 = vmax.f32 %v407, 0.0
    %v412 = vld [vmem:[%s7] sm:$0x1]
    %v413 = vlaneseq
    %v414 = vshrl.u32 %v413, 7
    %v415 = vsub.s32 0, %v414
    %v416 = vrot.slane %v412, %v415
    %v417 = vmul.f32 %v210, %v416
    %v418 = vmul.f32 %v211, %v416
    %419 = vadd.xlane.f32.xlu0 %v417
    %v420 = vpop.xlane.xlu0 %419
    %421 = vadd.xlane.f32.xlu0 %v418
    %v422 = vpop.xlane.xlu0 %421
    %v423 = vld [vmem:[%s7 + $0x1] sm:$0x1]
    %v424 = vlaneseq
    %v425 = vshrl.u32 %v424, 7
    %v426 = vsub.s32 0, %v425
    %v427 = vrot.slane %v423, %v426
    %v428 = vmul.f32 %v310, %v427
    %v429 = vmul.f32 %v311, %v427
    %430 = vadd.xlane.f32.xlu0 %v428
    %v431 = vpop.xlane.xlu0 %430
    %432 = vadd.xlane.f32.xlu0 %v429
    %v433 = vpop.xlane.xlu0 %432
    %v434 = vld [vmem:[%s7 + $0x2] sm:$0x1]
    %v435 = vlaneseq
    %v436 = vshrl.u32 %v435, 7
    %v437 = vsub.s32 0, %v436
    %v438 = vrot.slane %v434, %v437
    %v439 = vmul.f32 %v410, %v438
    %v440 = vmul.f32 %v411, %v438
    %441 = vadd.xlane.f32.xlu0 %v439
    %v442 = vpop.xlane.xlu0 %441
    %443 = vadd.xlane.f32.xlu0 %v440
    %v444 = vpop.xlane.xlu0 %443
    %v445 = vmax.f32 %v420, %v431
    %v446 = vmax.f32 %v422, %v433
    %v447 = vmax.f32 %v445, %v442
    %v448 = vmax.f32 %v446, %v444
    %v449 = vsub.f32 %v420, %v447
    %v450 = vsub.f32 %v422, %v448
    %v451 = vmul.f32 %v449, 1.442695
    %v452 = vpow.pop %v451
    %v453 = vmul.f32 %v450, 1.442695
    %v454 = vpow.pop %v453
    %v455 = vsub.f32 %v431, %v447
    %v456 = vsub.f32 %v433, %v448
    %v457 = vmul.f32 %v455, 1.442695
    %v458 = vpow.pop %v457
    %v459 = vmul.f32 %v456, 1.442695
    %v460 = vpow.pop %v459
    %v461 = vsub.f32 %v442, %v447
    %v462 = vsub.f32 %v444, %v448
    %v463 = vmul.f32 %v461, 1.442695
    %v464 = vpow.pop %v463
    %v465 = vmul.f32 %v462, 1.442695
    %v466 = vpow.pop %v465
    %v467 = vadd.f32 %v452, %v458
    %v468 = vadd.f32 %v454, %v460
    %v469 = vadd.f32 %v467, %v464
    %v470 = vadd.f32 %v468, %v466
    %v471 = vrcp.pop %v469
    %v472 = vmul.f32 1.0, %v471
    %v473 = vrcp.pop %v470
    %v474 = vmul.f32 1.0, %v473
    %v475 = vmul.f32 %v210, %v452
    %v476 = vmul.f32 %v211, %v454
    %v477 = vmul.f32 %v310, %v458
    %v478 = vmul.f32 %v311, %v460
    %v479 = vadd.f32 %v475, %v477
    %v480 = vadd.f32 %v476, %v478
    %v481 = vmul.f32 %v410, %v464
    %v482 = vmul.f32 %v411, %v466
    %v483 = vadd.f32 %v479, %v481
    %v484 = vadd.f32 %v480, %v482
    %v485 = vmul.f32 %v483, %v472
    %v486 = vmul.f32 %v484, %v474
    %487 = vst [vmem:[#allocation13] sm:$0xff] %v485
    %488 = vst [vmem:[#allocation13 + $0x8] sm:$0xff] %v486
    // Predicated region
    $region58: #{tpu_custom_call.1} parent=1 // pred_check
      _
    $region59: #{tpu_custom_call.1} parent=1 // pred_check_branch
      %490 = sbr.rel (0) target = $region61
    $region60: #{tpu_custom_call.1} parent=1 // pred_region
      %s492 = ssub.s32 256, 256
      %493 = vsyncadd [#allocation4], %s492
      %s494 = sshll.u32 [#allocation13], 4
      %s495 = int_to_ptr.vmem [resolvable:$true] %s494
      %500 = dma.vmem_to_hbm [thread:$0]  %s495, 256, %s8, [#allocation4], 128, 128, 8
    $region61: #{tpu_custom_call.1} parent=1 // pred_fallthru
      _
    // Predicated region
    $region62: #{tpu_custom_call.1} parent=1 // pred_check
      _
    $region63: #{tpu_custom_call.1} parent=1 // pred_check_branch
      %502 = sbr.rel (0) target = $region65
    $region64: #{tpu_custom_call.1} parent=1 // pred_region
      %503 = dma.done [#allocation4], 256
    $region65: #{tpu_custom_call.1} parent=1 // pred_fallthru
      _
    %504 = vsyncpa [#allocation3], 1
    %505 = vsyncpa [#allocation6], 1
    %506 = vsyncpa [#allocation9], 1
    %507 = vsyncpa [#allocation12], 1
    %508 = vsyncpa [#allocation4], 1

</llo_original>
